<compile_context>
chip_gen: v7x
topology: tpu7x:2x2x1
jax: 0.10.0
libtpu: 0.0.40
codegen_flags: <defaults>
</compile_context>

<pallas_src>
import functools

import jax
import jax.numpy as jnp
from jax.experimental import pallas as pl
from jax.experimental.pallas import tpu as pltpu


def _lrn_kernel(x_ref, o_ref, *, local_size: int, alpha: float, beta: float):
    # Block is (1, C, T_HW): full channel dim on sublanes, lane-dense spatial tile.
    xb = x_ref[...]
    x = xb[0].astype(jnp.float32)          # (C, T_HW)
    x2 = x * x

    c = x.shape[0]
    pad = (local_size - 1) // 2

    if pad == 0:
        avg = x2
    else:
        # Cross-channel windowed sum as a banded (C, C) constant matmul on the
        # MXU (band built from iota inside the kernel -> no materialized
        # constants, no sublane-offset slices / concatenate relayouts).
        row = jax.lax.broadcasted_iota(jnp.int32, (c, c), 0)
        col = jax.lax.broadcasted_iota(jnp.int32, (c, c), 1)
        d = row - col
        band = ((d <= pad) & (d >= -pad)).astype(jnp.float32)
        acc = jnp.dot(band, x2, preferred_element_type=jnp.float32)
        # AvgPool3d default count_include_pad=True -> always divide by local_size.
        avg = acc * (1.0 / float(local_size))

    # out = x * (1 + alpha*avg)^(-beta), fused: removes the separate divide.
    base = avg * float(alpha) + 1.0
    out = x * jnp.exp((-float(beta)) * jnp.log(base))
    o_ref[...] = out[None].astype(o_ref.dtype)


def _choose_tile_hw(hw: int, c: int) -> int:
    """Lane tile: multiple of 128, sized so double-buffered in/out blocks plus
    in-kernel f32 temporaries stay well inside scoped VMEM on v5e/v6e/v7x."""
    budget_bytes = 24 * 1024 * 1024   # conservative w.r.t. v7x (64 MiB physical)
    bufs = 12                         # 2 in + 2 out double-buffers + ~8 f32 temps
    max_t = budget_bytes // (4 * max(c, 1) * bufs)
    t = max(128, min(2048, (max_t // 128) * 128))
    hw_up = ((hw + 127) // 128) * 128   # keep stores lane-dense
    return min(t, hw_up)


def lrn_pallas(x, local_size=1, alpha=1.0, beta=0.75):
    """x: (N, C, H, W) float32, NCHW — same convention as the PyTorch module.

    Implements the ACROSS_CHANNELS=True path.
    """
    # Even local_size would break the PyTorch module itself (channel dim shrinks);
    # restrict to odd windows.
    assert local_size % 2 == 1, "local_size must be odd"
    # TODO(synk): ACROSS_CHANNELS=False (spatial AvgPool2d LRN) not implemented.

    n, c, h, w = x.shape
    hw = h * w
    x3 = x.reshape(n, c, hw)

    t_hw = _choose_tile_hw(hw, c)
    hw_pad = ((hw + t_hw - 1) // t_hw) * t_hw
    if hw_pad != hw:
        # Zero-pad the fused spatial axis so every tile is full-width
        # (lane-dense, unmasked stores).  Padded lanes are independent
        # (cross-channel window only) and are sliced off afterwards.
        x3 = jnp.pad(x3, ((0, 0), (0, 0), (0, hw_pad - hw)))
    num_hw_tiles = hw_pad // t_hw

    kernel = functools.partial(
        _lrn_kernel, local_size=int(local_size), alpha=float(alpha), beta=float(beta)
    )

    # Explicit VMEM budget derived from the tile (don't rely on scoped default).
    block_bytes = 4 * c * t_hw
    vmem_limit = int(min(64 * 1024 * 1024, max(16 * 1024 * 1024, 16 * block_bytes)))

    out = pl.pallas_call(
        kernel,
        out_shape=jax.ShapeDtypeStruct((n, c, hw_pad), x.dtype),
        grid_spec=pltpu.PrefetchScalarGridSpec(
            num_scalar_prefetch=0,
            grid=(n, num_hw_tiles),
            in_specs=[pl.BlockSpec((1, c, t_hw), lambda i, j: (i, 0, j))],
            out_specs=pl.BlockSpec((1, c, t_hw), lambda i, j: (i, 0, j)),
        ),
        compiler_params=pltpu.CompilerParams(
            dimension_semantics=("parallel", "parallel"),
            vmem_limit_bytes=vmem_limit,
        ),
    )(x3)

    if hw_pad != hw:
        out = out[:, :, :hw]
    return out.reshape(n, c, h, w)


def _lrn_reference(x, local_size=1, alpha=1.0, beta=0.75):
    # Pure-JAX reference mirroring the PyTorch semantics (count_include_pad).
    n, c, h, w = x.shape
    pad = (local_size - 1) // 2
    x2 = x * x
    x2p = jnp.pad(x2, ((0, 0), (pad, pad), (0, 0), (0, 0)))
    acc = sum(x2p[:, d:d + c] for d in range(local_size))
    div = jnp.power(acc / local_size * alpha + 1.0, beta)
    return x / div


if __name__ == "__main__":
    key = jax.random.PRNGKey(0)
    x = jax.random.normal(key, (2, 4, 16, 16), dtype=jnp.float32)

    # Module defaults: local_size=1, alpha=1.0, beta=0.75, ACROSS_CHANNELS=True
    out = lrn_pallas(x, local_size=1, alpha=1.0, beta=0.75)
    out = jax.block_until_ready(out)

    ref = _lrn_reference(x, local_size=1, alpha=1.0, beta=0.75)
    assert out.shape == x.shape and out.dtype == x.dtype
    assert jnp.allclose(out, ref, atol=3e-5, rtol=3e-5)

    # Also exercise a wider cross-channel window (local_size=3).
    out3 = jax.block_until_ready(lrn_pallas(x, local_size=3, alpha=2.0, beta=0.75))
    ref3 = _lrn_reference(x, local_size=3, alpha=2.0, beta=0.75)
    assert jnp.allclose(out3, ref3, atol=3e-5, rtol=3e-5)

    print("KERNEL_OK")
</pallas_src>

<mosaic_0001>
module attributes {stable_mosaic.version = 11 : i64} {
  func.func @_lrn_kernel(%arg0: i32, %arg1: i32, %arg2: memref<1x4x256xf32, #tpu.memory_space<vmem>>, %arg3: memref<1x4x256xf32, #tpu.memory_space<vmem>>) attributes {dimension_semantics = [#tpu.dimension_semantics<parallel>, #tpu.dimension_semantics<parallel>], iteration_bounds = array<i64: 2, 1>, scalar_prefetch = 0 : i64, scratch_operands = 0 : i64, tpu.core_type = #tpu.core_type<tc>, window_params = [{transform_indices = @transform_0, window_bounds = array<i64: 1, 4, 256>}, {transform_indices = @transform_1, window_bounds = array<i64: 1, 4, 256>}]} {
    %c0 = arith.constant 0 : index
    %c0_0 = arith.constant 0 : index
    %c0_1 = arith.constant 0 : index
    %0 = vector.load %arg2[%c0, %c0_0, %c0_1] : memref<1x4x256xf32, #tpu.memory_space<vmem>>, vector<1x4x256xf32>
    %1 = vector.shape_cast %0 : vector<1x4x256xf32> to vector<4x256xf32>
    %2 = arith.mulf %1, %1 : vector<4x256xf32>
    %cst = arith.constant 1.000000e+00 : f32
    %3 = vector.broadcast %cst : f32 to vector<4x256xf32>
    %4 = arith.mulf %2, %3 : vector<4x256xf32>
    %cst_2 = arith.constant 1.000000e+00 : f32
    %5 = vector.broadcast %cst_2 : f32 to vector<4x256xf32>
    %6 = arith.addf %4, %5 : vector<4x256xf32>
    %7 = math.log %6 : vector<4x256xf32>
    %cst_3 = arith.constant -7.500000e-01 : f32
    %8 = vector.broadcast %cst_3 : f32 to vector<4x256xf32>
    %9 = arith.mulf %8, %7 : vector<4x256xf32>
    %10 = math.exp %9 : vector<4x256xf32>
    %11 = arith.mulf %1, %10 : vector<4x256xf32>
    %12 = vector.shape_cast %11 : vector<4x256xf32> to vector<1x4x256xf32>
    %c0_4 = arith.constant 0 : index
    %c0_5 = arith.constant 0 : index
    %c0_6 = arith.constant 0 : index
    %13 = vector.load %arg3[%c0_4, %c0_5, %c0_6] : memref<1x4x256xf32, #tpu.memory_space<vmem>>, vector<1x4x256xf32>
    tpu.vector_store %arg3[%c0_4, %c0_5, %c0_6], %12 {strides = array<i32>} : memref<1x4x256xf32, #tpu.memory_space<vmem>>, vector<1x4x256xf32>,
    return
  }
  func.func @transform_0(%arg0: i32, %arg1: i32) -> (i32, i32, i32) {
    %c0_i32 = arith.constant 0 : i32
    %c0_i32_0 = arith.constant 0 : i32
    return %arg0, %c0_i32, %arg1 : i32, i32, i32
  }
  func.func @transform_1(%arg0: i32, %arg1: i32) -> (i32, i32, i32) {
    %c0_i32 = arith.constant 0 : i32
    %c0_i32_0 = arith.constant 0 : i32
    return %arg0, %c0_i32, %arg1 : i32, i32, i32
  }
}

</mosaic_0001>

<llo_original>
// kernel: tpu_custom_call.1
$region0: #{tpu_custom_call.1}
  #allocation0 [shape = 'u32[]', space=smem, size = 0x4, offset = 0x4, fixed_abs, tag = 'smem constant byte address 0x4 - core index']
  #allocation1 [shape = 'u32[144,128]{1,0:T(1,128)}', space=vmem, size = 0x12000, scoped, tag = 'internal scratch']
  %s0 = inlined_call_operand.hbm [shape: f32[2,4,256], index: 0, kind: input, shape index: {}]
  %s1 = inlined_call_operand.hbm [shape: f32[2,4,256], index: 1, kind: output, shape index: {}]
  %s2 = sld [smem:[#allocation0]]
  $region41: #{tpu_custom_call.1} parent=0
    _
  %s4 = ssub.s32 1, %s2
  %s5 = scalar_select 0, %s4, %s2
  $region1: #{tpu_custom_call.1} parent=0
    #allocation2 [shape = 'u8[8192]{0}', space=vmem, size = 0x2000, scoped, tag = 'input window, operand 0']
    #allocation3 [shape = 's32[2]{0}', space=sflag, size = 0x8, scoped, tag = 'scoped memory for tpu_custom_call.1']
    #allocation4 [shape = 's32[2]{0}', space=sflag, size = 0x8, scoped, tag = 'scoped memory for tpu_custom_call.1']
    #allocation5 [shape = 'u8[8192]{0}', space=vmem, size = 0x2000, scoped, tag = 'output window, operand 0']
    %6 = vsyncpa [#allocation3], 0
    %s7 = scalar_lea.sflag [#allocation3], 1
    %8 = vsyncpa %s7, 0
    %9 = vsyncpa [#allocation4], 0
    %s10 = scalar_lea.sflag [#allocation4], 1
    %11 = vsyncpa %s10, 0
    loop: start=0, step=1, limit=4
    $region2: #{tpu_custom_call.1} parent=1 // loop_pre_header
      _
    $region3: #{tpu_custom_call.1} parent=1 // loop_header
      %s13 = sphi 0, %s17
      %p14 = scmp.ge.s32.totalorder %s13, 4
      %s20 = sphi 0, %s32
      %s21 = sphi 0, %s28
      %s22 = sphi 0, %s20
      %s23 = sphi 0, %s21
      %s24 = sphi 0, %s22
      %s25 = sphi 0, %s23
      %s37 = sphi 0, %s39
      %s40 = sphi 0, %s37
      %s41 = sphi 0, %s40
      %s57 = sphi 0, %s41
      %s65 = sphi 0, %s67
      %s68 = sphi 0, %s65
      %s69 = sphi 0, %s68
      %s85 = sphi 0, %s69
    $region4: #{tpu_custom_call.1} parent=1 // loop_header_branch
      %16 = sbr.rel (%p14) target = $region8
    $region5: #{tpu_custom_call.1} parent=1 // loop_body
      %s18 = ssub.s32 %s13, 1
      %s19 = ssub.s32 %s13, 2
      %s26 = sadd.s32 1, %s21
      %p27 = scmp.ge.s32.totalorder %s26, 1
      %s28 = scalar_select %p27, 0, %s26
      %s29 = sadd.s32 1, %s20
      %s30 = scalar_select %p27, %s29, %s20
      %p31 = scmp.ge.s32.totalorder %s30, 2
      %s32 = scalar_select %p31, 0, %s30
      %s33 = ssub.s32 %s20, %s32
      %s34 = ssub.s32 %s21, %s28
      %s35 = sor.u32 %s33, %s34
      %p36 = scmp.eq.s32.totalorder %s35, 0
      %s38 = sadd.s32 %s37, 1
      %s39 = scalar_select %p36, %s37, %s38
      %p42 = pneg %p36
      %p43 = scmp.eq.s32.totalorder %s13, 1
      %p44 = por %p42, %p43
      %p45 = scmp.ne.s32.totalorder %s37, %s40
      %p46 = scmp.eq.s32.totalorder %s13, 0
      %p47 = por %p45, %p46
      %p48 = scmp.ne.s32.totalorder %s37, %s40
      %p49 = scmp.eq.s32.totalorder %s18, 1
      %p50 = por %p48, %p49
      %p51 = scmp.ne.s32.totalorder %s40, %s41
      %p52 = scmp.eq.s32.totalorder %s18, 0
      %p53 = por %p51, %p52
      %p54 = scmp.ne.s32.totalorder %s40, %s41
      %p55 = scmp.eq.s32.totalorder %s19, 1
      %p56 = por %p54, %p55
      %p58 = scmp.ne.s32.totalorder %s41, %s57
      %p59 = scmp.eq.s32.totalorder %s19, 0
      %p60 = por %p58, %p59
      %s61 = ssub.s32 %s20, %s32
      %s62 = ssub.s32 %s21, %s28
      %s63 = sor.u32 %s61, %s62
      %p64 = scmp.eq.s32.totalorder %s63, 0
      %s66 = sadd.s32 %s65, 1
      %s67 = scalar_select %p64, %s65, %s66
      %p70 = pneg %p64
      %p71 = scmp.eq.s32.totalorder %s13, 1
      %p72 = por %p70, %p71
      %p73 = scmp.ne.s32.totalorder %s65, %s68
      %p74 = scmp.eq.s32.totalorder %s13, 0
      %p75 = por %p73, %p74
      %p76 = scmp.ne.s32.totalorder %s65, %s68
      %p77 = scmp.eq.s32.totalorder %s18, 1
      %p78 = por %p76, %p77
      %p79 = scmp.ne.s32.totalorder %s68, %s69
      %p80 = scmp.eq.s32.totalorder %s18, 0
      %p81 = por %p79, %p80
      %p82 = scmp.ne.s32.totalorder %s68, %s69
      %p83 = scmp.eq.s32.totalorder %s19, 1
      %p84 = por %p82, %p83
      %p86 = scmp.ne.s32.totalorder %s69, %s85
      %p87 = scmp.eq.s32.totalorder %s19, 0
      %p88 = por %p86, %p87
      %p89 = scmp.le.s32.totalorder 1, %s13
      %p90 = scmp.lt.s32.totalorder %s13, 3
      %p91 = pnand %p89, %p90
      %p92 = pneg %p91
      // Predicated region
      $region9: #{tpu_custom_call.1} parent=5 // pred_check
        _
      $region10: #{tpu_custom_call.1} parent=5 // pred_check_branch
        %94 = sbr.rel (%p91) target = $region12
      $region11: #{tpu_custom_call.1} parent=5 // pred_region
        %s95 = ssub.s32 %s13, 1
      $region12: #{tpu_custom_call.1} parent=5 // pred_fallthru
        _
      %p96 = scmp.lt.s32.totalorder %s13, 2
      // Predicated region
      $region13: #{tpu_custom_call.1} parent=5 // pred_check
        %p97 = pneg %p96
      $region14: #{tpu_custom_call.1} parent=5 // pred_check_branch
        %99 = sbr.rel (%p97) target = $region16
      $region15: #{tpu_custom_call.1} parent=5 // pred_region
        // Predicated region
        $region17: #{tpu_custom_call.1} parent=15 // pred_check
          %p100 = pneg %p47
        $region18: #{tpu_custom_call.1} parent=15 // pred_check_branch
          %102 = sbr.rel (%p100) target = $region20
        $region19: #{tpu_custom_call.1} parent=15 // pred_region
          %s103 = sand.u32 %s37, 1
          %s104 = scalar_lea.sflag [#allocation3], %s103
          %s105 = sand.u32 %s37, 1
          %s106 = smul.addr %s105, 8
          %s107 = scalar_lea.vmem [#allocation2], %s106
          %s108 = smul.u32 2, %s21
          %s110 = ssub.s32 128, 128
          %111 = vsyncadd %s104, %s110
          %s112 = smul.addr %s20, 2
          %s113 = sadd.s32 %s108, %s112
          %s114 = smul.addr %s113, 64
          %s115 = scalar_lea.hbm %s0, %s114
          %s117 = sshll.u32 %s107, 4
          %s118 = int_to_ptr.vmem [resolvable:$true] %s117
          %120 = dma.hbm_to_vmem [thread:$0]  %s115, 128, %s118, %s104
        $region20: #{tpu_custom_call.1} parent=15 // pred_fallthru
          _
      $region16: #{tpu_custom_call.1} parent=5 // pred_fallthru
        _
      %p121 = scmp.le.s32.totalorder 1, %s13
      %p122 = scmp.lt.s32.totalorder %s13, 3
      %p123 = pnand %p121, %p122
      %p124 = pneg %p123
      // Predicated region
      $region21: #{tpu_custom_call.1} parent=5 // pred_check
        _
      $region22: #{tpu_custom_call.1} parent=5 // pred_check_branch
        %126 = sbr.rel (%p123) target = $region24
      $region23: #{tpu_custom_call.1} parent=5 // pred_region
        %s127 = ssub.s32 %s13, 1
        %s128 = sand.u32 %s40, 1
        %s129 = scalar_lea.sflag [#allocation3], %s128
        %s130 = sand.u32 %s40, 1
        %s131 = smul.addr %s130, 8
        %s132 = scalar_lea.vmem [#allocation2], %s131
        // Predicated region
        $region25: #{tpu_custom_call.1} parent=23 // pred_check
          %p133 = pneg %p53
        $region26: #{tpu_custom_call.1} parent=23 // pred_check_branch
          %135 = sbr.rel (%p133) target = $region28
        $region27: #{tpu_custom_call.1} parent=23 // pred_region
          %136 = dma.done %s129, 128
        $region28: #{tpu_custom_call.1} parent=23 // pred_fallthru
          _
        %s137 = sand.u32 %s40, 1
        %s138 = scalar_lea.sflag [#allocation3], %s137
        %s139 = sand.u32 %s40, 1
        %s140 = smul.addr %s139, 8
        %s141 = scalar_lea.vmem [#allocation2], %s140
        %p142 = pneg %p53
        %p143 = pneg %p50
        %p144 = pneg %p81
        %p145 = pneg %p78
        %s146 = sand.u32 %s68, 1
        %s147 = scalar_lea.sflag [#allocation4], %s146
        %s148 = sand.u32 %s68, 1
        %s149 = smul.addr %s148, 8
        %s150 = scalar_lea.vmem [#allocation5], %s149
        %s151 = smul.u32 2, %s23
        %s152 = smul.u32 2, %s23
        %v153 = vld [vmem:[%s132] sm:$0xff]
        %v154 = vmul.f32 %v153, %v153
        %v155 = vadd.f32 %v154, 1.0
        %v156 = vlog2.pop %v155
        %v157 = vmul.f32 %v156, 0.6931472
        %v158 = vmul.f32 %v157, -0.75
        %v159 = vmul.f32 %v158, 1.442695
        %v160 = vpow.pop %v159
        %v161 = vmul.f32 %v153, %v160
        %162 = vst [vmem:[%s150] sm:$0xff] %v161
        %s163 = sand.u32 %s68, 1
        %s164 = scalar_lea.sflag [#allocation4], %s163
        %s165 = sand.u32 %s68, 1
        %s166 = smul.addr %s165, 8
        %s167 = scalar_lea.vmem [#allocation5], %s166
        // Predicated region
        $region29: #{tpu_custom_call.1} parent=23 // pred_check
          %p168 = pneg %p78
        $region30: #{tpu_custom_call.1} parent=23 // pred_check_branch
          %170 = sbr.rel (%p168) target = $region32
        $region31: #{tpu_custom_call.1} parent=23 // pred_region
          %s171 = smul.u32 2, %s23
          %s173 = ssub.s32 128, 128
          %174 = vsyncadd %s164, %s173
          %s175 = smul.addr %s22, 2
          %s176 = sadd.s32 %s171, %s175
          %s177 = smul.addr %s176, 64
          %s178 = scalar_lea.hbm %s1, %s177
          %s180 = sshll.u32 %s167, 4
          %s181 = int_to_ptr.vmem [resolvable:$true] %s180
          %183 = dma.vmem_to_hbm [thread:$0]  %s181, 128, %s178, %s164
        $region32: #{tpu_custom_call.1} parent=23 // pred_fallthru
          _
      $region24: #{tpu_custom_call.1} parent=5 // pred_fallthru
        _
      %p184 = scmp.le.s32.totalorder 2, %s13
      // Predicated region
      $region33: #{tpu_custom_call.1} parent=5 // pred_check
        %p185 = pneg %p184
      $region34: #{tpu_custom_call.1} parent=5 // pred_check_branch
        %187 = sbr.rel (%p185) target = $region36
      $region35: #{tpu_custom_call.1} parent=5 // pred_region
        %s188 = ssub.s32 %s13, 2
        // Predicated region
        $region37: #{tpu_custom_call.1} parent=35 // pred_check
          %p189 = pneg %p84
        $region38: #{tpu_custom_call.1} parent=35 // pred_check_branch
          %191 = sbr.rel (%p189) target = $region40
        $region39: #{tpu_custom_call.1} parent=35 // pred_region
          %s192 = sand.u32 %s69, 1
          %s193 = scalar_lea.sflag [#allocation4], %s192
          %s194 = sand.u32 %s69, 1
          %s195 = smul.addr %s194, 8
          %s196 = scalar_lea.vmem [#allocation5], %s195
          %197 = dma.done %s193, 128
        $region40: #{tpu_custom_call.1} parent=35 // pred_fallthru
          _
      $region36: #{tpu_custom_call.1} parent=5 // pred_fallthru
        _
    $region6: #{tpu_custom_call.1} parent=1 // loop_footer
      %s17 = sadd.s32 1, %s13
    $region7: #{tpu_custom_call.1} parent=1 // loop_footer_branch
      %12 = sbr.rel target = $region3
    $region8: #{tpu_custom_call.1} parent=1 // loop_exit
      _
    %198 = vsyncpa [#allocation3], 1
    %s199 = scalar_lea.sflag [#allocation3], 1
    %200 = vsyncpa %s199, 1
    %201 = vsyncpa [#allocation4], 1
    %s202 = scalar_lea.sflag [#allocation4], 1
    %203 = vsyncpa %s202, 1

</llo_original>
